<compile_context>
chip_gen: v7x
topology: tpu7x:2x2x1
jax: 0.10.0
libtpu: 0.0.40
codegen_flags: <defaults>
</compile_context>

<pallas_src>
import jax
import jax.numpy as jnp
from jax.experimental import pallas as pl
from jax.experimental.pallas import tpu as pltpu

# Force multi-pass f32 MXU matmul in both kernel and reference so the
# correctness check is not at the mercy of default-precision truncation.
MXU_PRECISION = jax.lax.Precision.HIGHEST


def decoder_seq_kernel(x_ref, h0_ref, c0_ref, wx_ref, wh_ref, b_ref,
                       h_out_ref, c_out_ref, h_sc, c_sc):
    """One timestep of the decoder cell; grid axis 0 iterates over time.

    x_ref:    (1, B, P)   input for this timestep (streamed per grid step)
    h0_ref:   (B, H)      initial Hidden_State (loaded once)
    c0_ref:   (B, H)      initial Cell_State   (loaded once)
    wx_ref:   (P, 4H)     fused [fl|il|ol|Cl] weights acting on the input part
    wh_ref:   (H, 4H)     fused [fl|il|ol|Cl] weights acting on the hidden part
    b_ref:    (1, 4H)     fused biases
    h_out_ref/c_out_ref: (B, H) final states (written at the last step only)
    h_sc/c_sc: (B, H) f32 VMEM scratch carrying the recurrence across steps
    """
    t = pl.program_id(0)
    H = h_sc.shape[1]

    @pl.when(t == 0)
    def _init():
        h_sc[...] = h0_ref[...].astype(jnp.float32)
        c_sc[...] = c0_ref[...].astype(jnp.float32)

    x_t = x_ref[0]            # (B, P)
    h = h_sc[...]             # (B, H), f32
    c = c_sc[...]

    # cat([x, h], 1) @ W_fused  ==  x @ Wx + h @ Wh   (concat never materialized)
    z = (jnp.dot(x_t, wx_ref[...],
                 preferred_element_type=jnp.float32, precision=MXU_PRECISION)
         + jnp.dot(h.astype(wh_ref.dtype), wh_ref[...],
                   preferred_element_type=jnp.float32, precision=MXU_PRECISION)
         + b_ref[...])

    # Gate order [f | i | o | C]; 4H == 128 lanes at H=32 -> intra-vreg slices.
    f = jax.nn.sigmoid(z[:, 0 * H:1 * H])
    i = jax.nn.sigmoid(z[:, 1 * H:2 * H])
    o = jax.nn.sigmoid(z[:, 2 * H:3 * H])
    Cg = jnp.tanh(z[:, 3 * H:4 * H])

    c_new = f * c + i * Cg
    h_new = o * jnp.tanh(c_new)
    c_sc[...] = c_new
    h_sc[...] = h_new

    @pl.when(t == pl.num_programs(0) - 1)
    def _finalize():
        h_out_ref[...] = h_new.astype(h_out_ref.dtype)
        c_out_ref[...] = c_new.astype(c_out_ref.dtype)


def decoder_forward_seq(x_seq, h0, c0, wx, wh, b):
    """Run T consecutive Decoder.forward steps inside a single pallas_call.

    x_seq: (T, B, P)   per-step inputs
    h0,c0: (B, H)      initial states
    wx:    (P, 4H)  wh: (H, 4H)  b: (1, 4H)
    Returns (Hidden_State, Cell_State) after the last step, each (B, H).
    """
    T, B, P = x_seq.shape
    H = h0.shape[1]

    grid_spec = pltpu.PrefetchScalarGridSpec(
        num_scalar_prefetch=0,
        grid=(T,),
        in_specs=[
            pl.BlockSpec((1, B, P), lambda t: (t, 0, 0)),   # x_t: new block per step
            pl.BlockSpec((B, H), lambda t: (0, 0)),         # h0:  loaded once
            pl.BlockSpec((B, H), lambda t: (0, 0)),         # c0:  loaded once
            pl.BlockSpec((P, 4 * H), lambda t: (0, 0)),     # Wx:  loaded once
            pl.BlockSpec((H, 4 * H), lambda t: (0, 0)),     # Wh:  loaded once
            pl.BlockSpec((1, 4 * H), lambda t: (0, 0)),     # b:   loaded once
        ],
        out_specs=(
            pl.BlockSpec((B, H), lambda t: (0, 0)),         # VMEM-resident, 1 writeback
            pl.BlockSpec((B, H), lambda t: (0, 0)),
        ),
        scratch_shapes=[pltpu.VMEM((B, H), jnp.float32),    # h carry
                        pltpu.VMEM((B, H), jnp.float32)],   # c carry
    )

    return pl.pallas_call(
        decoder_seq_kernel,
        out_shape=(jax.ShapeDtypeStruct((B, H), h0.dtype),
                   jax.ShapeDtypeStruct((B, H), c0.dtype)),
        grid_spec=grid_spec,
        compiler_params=pltpu.CompilerParams(
            dimension_semantics=("arbitrary",)),   # time is a carried recurrence
    )(x_seq, h0, c0, wx, wh, b)


def decoder_forward(x, h, c, wx, wh, b):
    """Single step, exact Decoder.forward(input, Hidden_State, Cell_State)."""
    return decoder_forward_seq(x[None], h, c, wx, wh, b)


def make_decoder_params(key, num_inputs, hidden_size, dtype=jnp.float32):
    """Init the four gate Linears (fl, il, ol, Cl) torch-style, fused & split.

    Each nn.Linear(P+H, H): weight (H, P+H), bias (H,). We store transposed and
    fuse along the output axis as [f | i | o | C], then split rows into the
    input part Wx (P, 4H) and hidden part Wh (H, 4H).
    """
    in_features = num_inputs + hidden_size
    keys = jax.random.split(key, 8)
    bound = 1.0 / jnp.sqrt(in_features)          # torch Linear default init range
    ws = [jax.random.uniform(keys[k], (in_features, hidden_size), dtype,
                             minval=-bound, maxval=bound) for k in range(4)]
    bs = [jax.random.uniform(keys[4 + k], (hidden_size,), dtype,
                             minval=-bound, maxval=bound) for k in range(4)]
    w_fused = jnp.concatenate(ws, axis=1)                   # (P+H, 4H)
    b_fused = jnp.concatenate(bs, axis=0).reshape(1, -1)    # (1, 4H)
    return w_fused[:num_inputs], w_fused[num_inputs:], b_fused


def reference_step(x, h, c, wx, wh, b):
    """Pure-JAX reference of Decoder.forward (concat form, as in PyTorch)."""
    H = h.shape[1]
    combined = jnp.concatenate([x, h], axis=1)
    w = jnp.concatenate([wx, wh], axis=0)
    z = jnp.dot(combined, w, precision=MXU_PRECISION) + b
    f = jax.nn.sigmoid(z[:, 0 * H:1 * H])
    i = jax.nn.sigmoid(z[:, 1 * H:2 * H])
    o = jax.nn.sigmoid(z[:, 2 * H:3 * H])
    C = jnp.tanh(z[:, 3 * H:4 * H])
    c_new = f * c + i * C
    h_new = o * jnp.tanh(c_new)
    return h_new, c_new


if __name__ == "__main__":
    # Shapes consistent with the module: stream='s1' -> input is the 5 MoG
    # params; hidden_size = cell_size = 32; batch = 4; time_step = 8.
    batch = 4
    hidden_size = 32
    num_mog_params = 5
    time_step = 8

    key = jax.random.PRNGKey(0)
    k_x, k_h, k_c, k_p = jax.random.split(key, 4)

    x_seq = jax.random.normal(k_x, (time_step, batch, num_mog_params), jnp.float32)
    h0 = jax.random.normal(k_h, (batch, hidden_size), jnp.float32)   # Hidden_State
    c0 = jax.random.normal(k_c, (batch, hidden_size), jnp.float32)   # Cell_State
    wx, wh, b = make_decoder_params(k_p, num_mog_params, hidden_size)

    # Fused-sequence kernel: all T steps inside one pallas_call.
    h_T, c_T = decoder_forward_seq(x_seq, h0, c0, wx, wh, b)
    jax.block_until_ready((h_T, c_T))

    # Single-step API (== Decoder.forward).
    h_1, c_1 = decoder_forward(x_seq[0], h0, c0, wx, wh, b)
    jax.block_until_ready((h_1, c_1))

    # Pure-JAX references.
    def scan_body(carry, x):
        h, c = carry
        h2, c2 = reference_step(x, h, c, wx, wh, b)
        return (h2, c2), None
    (h_ref, c_ref), _ = jax.lax.scan(scan_body, (h0, c0), x_seq)
    h1_ref, c1_ref = reference_step(x_seq[0], h0, c0, wx, wh, b)

    assert jnp.allclose(h_T, h_ref, atol=1e-4, rtol=1e-4)
    assert jnp.allclose(c_T, c_ref, atol=1e-4, rtol=1e-4)
    assert jnp.allclose(h_1, h1_ref, atol=1e-4, rtol=1e-4)
    assert jnp.allclose(c_1, c1_ref, atol=1e-4, rtol=1e-4)

    # TODO(synk): Decoder.loop's linear1 MoG projection, the s1 chunk/tanh/exp
    # post-processing and the random initHidden/initMogParams buffers remain
    # host-side driver code; here the per-step inputs are supplied externally.
    print("KERNEL_OK")
</pallas_src>

<mosaic_0001>
module attributes {stable_mosaic.version = 11 : i64} {
  func.func @decoder_seq_kernel(%arg0: i32, %arg1: memref<1x4x5xf32, #tpu.memory_space<vmem>>, %arg2: memref<4x32xf32, #tpu.memory_space<vmem>>, %arg3: memref<4x32xf32, #tpu.memory_space<vmem>>, %arg4: memref<5x128xf32, #tpu.memory_space<vmem>>, %arg5: memref<32x128xf32, #tpu.memory_space<vmem>>, %arg6: memref<1x128xf32, #tpu.memory_space<vmem>>, %arg7: memref<4x32xf32, #tpu.memory_space<vmem>>, %arg8: memref<4x32xf32, #tpu.memory_space<vmem>>, %arg9: memref<4x32xf32, #tpu.memory_space<vmem>>, %arg10: memref<4x32xf32, #tpu.memory_space<vmem>>) attributes {dimension_semantics = [#tpu.dimension_semantics<arbitrary>], iteration_bounds = array<i64: 8>, scalar_prefetch = 0 : i64, scratch_operands = 2 : i64, tpu.core_type = #tpu.core_type<tc>, window_params = [{transform_indices = @transform_0, window_bounds = array<i64: 1, 4, 5>}, {pipeline_mode = #tpu.pipeline_mode<synchronous>, transform_indices = @transform_1, window_bounds = array<i64: 4, 32>}, {pipeline_mode = #tpu.pipeline_mode<synchronous>, transform_indices = @transform_2, window_bounds = array<i64: 4, 32>}, {pipeline_mode = #tpu.pipeline_mode<synchronous>, transform_indices = @transform_3, window_bounds = array<i64: 5, 128>}, {pipeline_mode = #tpu.pipeline_mode<synchronous>, transform_indices = @transform_4, window_bounds = array<i64: 32, 128>}, {pipeline_mode = #tpu.pipeline_mode<synchronous>, transform_indices = @transform_5, window_bounds = array<i64: 1, 128>}, {pipeline_mode = #tpu.pipeline_mode<synchronous>, transform_indices = @transform_6, window_bounds = array<i64: 4, 32>}, {pipeline_mode = #tpu.pipeline_mode<synchronous>, transform_indices = @transform_7, window_bounds = array<i64: 4, 32>}]} {
    %c0_i32 = arith.constant 0 : i32
    %0 = arith.cmpi eq, %arg0, %c0_i32 : i32
    %1 = arith.extui %0 : i1 to i32
    %c0_i32_0 = arith.constant 0 : i32
    %2 = arith.cmpi ne, %1, %c0_i32_0 : i32
    scf.if %2 {
      %c0_22 = arith.constant 0 : index
      %c0_23 = arith.constant 0 : index
      %45 = vector.load %arg2[%c0_22, %c0_23] : memref<4x32xf32, #tpu.memory_space<vmem>>, vector<4x32xf32>
      %c0_24 = arith.constant 0 : index
      %c0_25 = arith.constant 0 : index
      %46 = vector.load %arg9[%c0_24, %c0_25] : memref<4x32xf32, #tpu.memory_space<vmem>>, vector<4x32xf32>
      tpu.vector_store %arg9[%c0_24, %c0_25], %45 {strides = array<i32>} : memref<4x32xf32, #tpu.memory_space<vmem>>, vector<4x32xf32>,
      %c0_26 = arith.constant 0 : index
      %c0_27 = arith.constant 0 : index
      %47 = vector.load %arg3[%c0_26, %c0_27] : memref<4x32xf32, #tpu.memory_space<vmem>>, vector<4x32xf32>
      %c0_28 = arith.constant 0 : index
      %c0_29 = arith.constant 0 : index
      %48 = vector.load %arg10[%c0_28, %c0_29] : memref<4x32xf32, #tpu.memory_space<vmem>>, vector<4x32xf32>
      tpu.vector_store %arg10[%c0_28, %c0_29], %47 {strides = array<i32>} : memref<4x32xf32, #tpu.memory_space<vmem>>, vector<4x32xf32>,
    } else {
    }
    %c0 = arith.constant 0 : index
    %c0_1 = arith.constant 0 : index
    %c0_2 = arith.constant 0 : index
    %3 = vector.load %arg1[%c0, %c0_1, %c0_2] : memref<1x4x5xf32, #tpu.memory_space<vmem>>, vector<1x4x5xf32>
    %4 = vector.shape_cast %3 : vector<1x4x5xf32> to vector<4x5xf32>
    %c0_3 = arith.constant 0 : index
    %c0_4 = arith.constant 0 : index
    %5 = vector.load %arg9[%c0_3, %c0_4] : memref<4x32xf32, #tpu.memory_space<vmem>>, vector<4x32xf32>
    %c0_5 = arith.constant 0 : index
    %c0_6 = arith.constant 0 : index
    %6 = vector.load %arg10[%c0_5, %c0_6] : memref<4x32xf32, #tpu.memory_space<vmem>>, vector<4x32xf32>
    %c0_7 = arith.constant 0 : index
    %c0_8 = arith.constant 0 : index
    %7 = vector.load %arg4[%c0_7, %c0_8] : memref<5x128xf32, #tpu.memory_space<vmem>>, vector<5x128xf32>
    %cst = arith.constant dense<0.000000e+00> : vector<4x128xf32>
    %8 = tpu.matmul %4, %7, %cst {dimension_numbers = #tpu.dot_dimension_numbers<[1], [0], [0], [1], [0, 0, 1, 1], [], []>, precision = #tpu.contract_precision<fp32>} : vector<4x5xf32>, vector<5x128xf32>, vector<4x128xf32> -> vector<4x128xf32>
    %c0_9 = arith.constant 0 : index
    %c0_10 = arith.constant 0 : index
    %9 = vector.load %arg5[%c0_9, %c0_10] : memref<32x128xf32, #tpu.memory_space<vmem>>, vector<32x128xf32>
    %cst_11 = arith.constant dense<0.000000e+00> : vector<4x128xf32>
    %10 = tpu.matmul %5, %9, %cst_11 {dimension_numbers = #tpu.dot_dimension_numbers<[1], [0], [0], [1], [0, 0, 1, 1], [], []>, precision = #tpu.contract_precision<fp32>} : vector<4x32xf32>, vector<32x128xf32>, vector<4x128xf32> -> vector<4x128xf32>
    %11 = arith.addf %8, %10 : vector<4x128xf32>
    %c0_12 = arith.constant 0 : index
    %c0_13 = arith.constant 0 : index
    %12 = vector.load %arg6[%c0_12, %c0_13] : memref<1x128xf32, #tpu.memory_space<vmem>>, vector<1x128xf32>
    %13 = vector.broadcast %12 : vector<1x128xf32> to vector<4x128xf32>
    %14 = arith.addf %11, %13 : vector<4x128xf32>
    %15 = vector.extract_strided_slice %14 {offsets = [0, 0], sizes = [4, 32], strides = [1, 1]} : vector<4x128xf32> to vector<4x32xf32>
    %16 = arith.negf %15 : vector<4x32xf32>
    %17 = math.exp %16 : vector<4x32xf32>
    %cst_14 = arith.constant 1.000000e+00 : f32
    %18 = vector.broadcast %cst_14 : f32 to vector<4x32xf32>
    %19 = arith.addf %18, %17 : vector<4x32xf32>
    %20 = arith.divf %18, %19 : vector<4x32xf32>
    %21 = vector.extract_strided_slice %14 {offsets = [0, 32], sizes = [4, 32], strides = [1, 1]} : vector<4x128xf32> to vector<4x32xf32>
    %22 = arith.negf %21 : vector<4x32xf32>
    %23 = math.exp %22 : vector<4x32xf32>
    %cst_15 = arith.constant 1.000000e+00 : f32
    %24 = vector.broadcast %cst_15 : f32 to vector<4x32xf32>
    %25 = arith.addf %24, %23 : vector<4x32xf32>
    %26 = arith.divf %24, %25 : vector<4x32xf32>
    %27 = vector.extract_strided_slice %14 {offsets = [0, 64], sizes = [4, 32], strides = [1, 1]} : vector<4x128xf32> to vector<4x32xf32>
    %28 = arith.negf %27 : vector<4x32xf32>
    %29 = math.exp %28 : vector<4x32xf32>
    %cst_16 = arith.constant 1.000000e+00 : f32
    %30 = vector.broadcast %cst_16 : f32 to vector<4x32xf32>
    %31 = arith.addf %30, %29 : vector<4x32xf32>
    %32 = arith.divf %30, %31 : vector<4x32xf32>
    %33 = vector.extract_strided_slice %14 {offsets = [0, 96], sizes = [4, 32], strides = [1, 1]} : vector<4x128xf32> to vector<4x32xf32>
    %34 = math.tanh %33 : vector<4x32xf32>
    %35 = arith.mulf %20, %6 : vector<4x32xf32>
    %36 = arith.mulf %26, %34 : vector<4x32xf32>
    %37 = arith.addf %35, %36 : vector<4x32xf32>
    %38 = math.tanh %37 : vector<4x32xf32>
    %39 = arith.mulf %32, %38 : vector<4x32xf32>
    %c0_17 = arith.constant 0 : index
    %c0_18 = arith.constant 0 : index
    %40 = vector.load %arg10[%c0_17, %c0_18] : memref<4x32xf32, #tpu.memory_space<vmem>>, vector<4x32xf32>
    tpu.vector_store %arg10[%c0_17, %c0_18], %37 {strides = array<i32>} : memref<4x32xf32, #tpu.memory_space<vmem>>, vector<4x32xf32>,
    %c0_19 = arith.constant 0 : index
    %c0_20 = arith.constant 0 : index
    %41 = vector.load %arg9[%c0_19, %c0_20] : memref<4x32xf32, #tpu.memory_space<vmem>>, vector<4x32xf32>
    tpu.vector_store %arg9[%c0_19, %c0_20], %39 {strides = array<i32>} : memref<4x32xf32, #tpu.memory_space<vmem>>, vector<4x32xf32>,
    %c7_i32 = arith.constant 7 : i32
    %42 = arith.cmpi eq, %arg0, %c7_i32 : i32
    %43 = arith.extui %42 : i1 to i32
    %c0_i32_21 = arith.constant 0 : i32
    %44 = arith.cmpi ne, %43, %c0_i32_21 : i32
    scf.if %44 {
      %c0_22 = arith.constant 0 : index
      %c0_23 = arith.constant 0 : index
      %45 = vector.load %arg7[%c0_22, %c0_23] : memref<4x32xf32, #tpu.memory_space<vmem>>, vector<4x32xf32>
      tpu.vector_store %arg7[%c0_22, %c0_23], %39 {strides = array<i32>} : memref<4x32xf32, #tpu.memory_space<vmem>>, vector<4x32xf32>,
      %c0_24 = arith.constant 0 : index
      %c0_25 = arith.constant 0 : index
      %46 = vector.load %arg8[%c0_24, %c0_25] : memref<4x32xf32, #tpu.memory_space<vmem>>, vector<4x32xf32>
      tpu.vector_store %arg8[%c0_24, %c0_25], %37 {strides = array<i32>} : memref<4x32xf32, #tpu.memory_space<vmem>>, vector<4x32xf32>,
    } else {
    }
    return
  }
  func.func @transform_0(%arg0: i32) -> (i32, i32, i32) {
    %c0_i32 = arith.constant 0 : i32
    %c0_i32_0 = arith.constant 0 : i32
    %c0_i32_1 = arith.constant 0 : i32
    return %arg0, %c0_i32, %c0_i32_0 : i32, i32, i32
  }
  func.func @transform_1(%arg0: i32) -> (i32, i32) {
    %c0_i32 = arith.constant 0 : i32
    %c0_i32_0 = arith.constant 0 : i32
    %c0_i32_1 = arith.constant 0 : i32
    return %c0_i32, %c0_i32_0 : i32, i32
  }
  func.func @transform_2(%arg0: i32) -> (i32, i32) {
    %c0_i32 = arith.constant 0 : i32
    %c0_i32_0 = arith.constant 0 : i32
    %c0_i32_1 = arith.constant 0 : i32
    return %c0_i32, %c0_i32_0 : i32, i32
  }
  func.func @transform_3(%arg0: i32) -> (i32, i32) {
    %c0_i32 = arith.constant 0 : i32
    %c0_i32_0 = arith.constant 0 : i32
    %c0_i32_1 = arith.constant 0 : i32
    return %c0_i32, %c0_i32_0 : i32, i32
  }
  func.func @transform_4(%arg0: i32) -> (i32, i32) {
    %c0_i32 = arith.constant 0 : i32
    %c0_i32_0 = arith.constant 0 : i32
    %c0_i32_1 = arith.constant 0 : i32
    return %c0_i32, %c0_i32_0 : i32, i32
  }
  func.func @transform_5(%arg0: i32) -> (i32, i32) {
    %c0_i32 = arith.constant 0 : i32
    %c0_i32_0 = arith.constant 0 : i32
    %c0_i32_1 = arith.constant 0 : i32
    return %c0_i32, %c0_i32_0 : i32, i32
  }
  func.func @transform_6(%arg0: i32) -> (i32, i32) {
    %c0_i32 = arith.constant 0 : i32
    %c0_i32_0 = arith.constant 0 : i32
    %c0_i32_1 = arith.constant 0 : i32
    return %c0_i32, %c0_i32_0 : i32, i32
  }
  func.func @transform_7(%arg0: i32) -> (i32, i32) {
    %c0_i32 = arith.constant 0 : i32
    %c0_i32_0 = arith.constant 0 : i32
    %c0_i32_1 = arith.constant 0 : i32
    return %c0_i32, %c0_i32_0 : i32, i32
  }
}

</mosaic_0001>

<llo_original>
// kernel: tpu_custom_call.1
$region0: #{tpu_custom_call.1}
  #allocation0 [shape = 'u32[]', space=smem, size = 0x4, offset = 0x4, fixed_abs, tag = 'smem constant byte address 0x4 - core index']
  #allocation1 [shape = 'u32[144,128]{1,0:T(1,128)}', space=vmem, size = 0x12000, scoped, tag = 'internal scratch']
  #allocation2 [shape = 'f32[4,32]{1,0:T(4,128)}', space=vmem, size = 0x800, scoped, tag = 'scratch operand']
  #allocation3 [shape = 'f32[4,32]{1,0:T(4,128)}', space=vmem, size = 0x800, scoped, tag = 'scratch operand']
  %s0 = inlined_call_operand.vmem [shape: f32[8,4,5], index: 0, kind: input, shape index: {}]
  %s1 = inlined_call_operand.vmem [shape: f32[4,32], index: 1, kind: input, shape index: {}]
  %s2 = inlined_call_operand.vmem [shape: f32[4,32], index: 2, kind: input, shape index: {}]
  %s3 = inlined_call_operand.vmem [shape: f32[5,128], index: 3, kind: input, shape index: {}]
  %s4 = inlined_call_operand.vmem [shape: f32[32,128], index: 4, kind: input, shape index: {}]
  %s5 = inlined_call_operand.vmem [shape: f32[1,128], index: 5, kind: input, shape index: {}]
  %s6 = inlined_call_operand.hbm [shape: f32[4,32], index: 6, kind: output, shape index: {0}]
  %s7 = inlined_call_operand.hbm [shape: f32[4,32], index: 7, kind: output, shape index: {1}]
  %8 = xla_tuple %s6, %s7
  %s9 = sld [smem:[#allocation0]]
  $region73: #{tpu_custom_call.1} parent=0
    _
  %s11 = ssub.s32 1, %s9
  %s12 = scalar_select 0, %s11, %s9
  $region1: #{tpu_custom_call.1} parent=0
    #allocation4 [shape = 'u8[2048]{0}', space=vmem, size = 0x800, scoped, tag = 'output window, operand 0, single buffered']
    #allocation5 [shape = 's32[2]{0}', space=sflag, size = 0x8, scoped, tag = 'scoped memory for tpu_custom_call.1']
    #allocation6 [shape = 'u8[2048]{0}', space=vmem, size = 0x800, scoped, tag = 'output window, operand 1, single buffered']
    #allocation7 [shape = 's32[1]{0}', space=sflag, size = 0x4, scoped, tag = 'scoped memory for tpu_custom_call.1']
    %13 = vsyncpa [#allocation5], 0
    %14 = vsyncpa [#allocation7], 0
    loop: start=0, step=1, limit=10
    $region2: #{tpu_custom_call.1} parent=1 // loop_pre_header
      _
    $region3: #{tpu_custom_call.1} parent=1 // loop_header
      %s16 = sphi 0, %s20
      %p17 = scmp.ge.s32.totalorder %s16, 10
      %s26 = sphi 0, %s28
      %s29 = sphi 0, %s26
      %s30 = sphi 0, %s29
      %s46 = sphi 0, %s30
      %s50 = sphi 0, %s50
      %s52 = sphi 0, %s50
      %s53 = sphi 0, %s52
      %s67 = sphi 0, %s53
      %s71 = sphi 0, %s71
      %s73 = sphi 0, %s71
      %s74 = sphi 0, %s73
      %s88 = sphi 0, %s74
      %s92 = sphi 0, %s92
      %s94 = sphi 0, %s92
      %s95 = sphi 0, %s94
      %s109 = sphi 0, %s95
      %s113 = sphi 0, %s113
      %s115 = sphi 0, %s113
      %s116 = sphi 0, %s115
      %s130 = sphi 0, %s116
      %s134 = sphi 0, %s134
      %s136 = sphi 0, %s134
      %s137 = sphi 0, %s136
      %s151 = sphi 0, %s137
      %s155 = sphi 0, %s155
      %s157 = sphi 0, %s155
      %s158 = sphi 0, %s157
      %s172 = sphi 0, %s158
      %s176 = sphi 0, %s176
      %s178 = sphi 0, %s176
      %s179 = sphi 0, %s178
      %s193 = sphi 0, %s179
    $region4: #{tpu_custom_call.1} parent=1 // loop_header_branch
      %19 = sbr.rel (%p17) target = $region8
    $region5: #{tpu_custom_call.1} parent=1 // loop_body
      %s21 = ssub.s32 %s16, 1
      %s22 = ssub.s32 %s16, 2
      %s23 = sadd.s32 %s16, 1
      %s24 = ssub.s32 %s16, %s23
      %p25 = scmp.eq.s32.totalorder %s24, 0
      %s27 = sadd.s32 %s26, 1
      %s28 = scalar_select %p25, %s26, %s27
      %p31 = pneg %p25
      %p32 = scmp.eq.s32.totalorder %s16, 7
      %p33 = por %p31, %p32
      %p34 = scmp.ne.s32.totalorder %s26, %s29
      %p35 = scmp.eq.s32.totalorder %s16, 0
      %p36 = por %p34, %p35
      %p37 = scmp.ne.s32.totalorder %s26, %s29
      %p38 = scmp.eq.s32.totalorder %s21, 7
      %p39 = por %p37, %p38
      %p40 = scmp.ne.s32.totalorder %s29, %s30
      %p41 = scmp.eq.s32.totalorder %s21, 0
      %p42 = por %p40, %p41
      %p43 = scmp.ne.s32.totalorder %s29, %s30
      %p44 = scmp.eq.s32.totalorder %s22, 7
      %p45 = por %p43, %p44
      %p47 = scmp.ne.s32.totalorder %s30, %s46
      %p48 = scmp.eq.s32.totalorder %s22, 0
      %p49 = por %p47, %p48
      %s51 = sadd.s32 %s50, 1
      %p54 = scmp.eq.s32.totalorder %s16, 7
      %p55 = scmp.ne.s32.totalorder %s50, %s52
      %p56 = scmp.eq.s32.totalorder %s16, 0
      %p57 = por %p55, %p56
      %p58 = scmp.ne.s32.totalorder %s50, %s52
      %p59 = scmp.eq.s32.totalorder %s21, 7
      %p60 = por %p58, %p59
      %p61 = scmp.ne.s32.totalorder %s52, %s53
      %p62 = scmp.eq.s32.totalorder %s21, 0
      %p63 = por %p61, %p62
      %p64 = scmp.ne.s32.totalorder %s52, %s53
      %p65 = scmp.eq.s32.totalorder %s22, 7
      %p66 = por %p64, %p65
      %p68 = scmp.ne.s32.totalorder %s53, %s67
      %p69 = scmp.eq.s32.totalorder %s22, 0
      %p70 = por %p68, %p69
      %s72 = sadd.s32 %s71, 1
      %p75 = scmp.eq.s32.totalorder %s16, 7
      %p76 = scmp.ne.s32.totalorder %s71, %s73
      %p77 = scmp.eq.s32.totalorder %s16, 0
      %p78 = por %p76, %p77
      %p79 = scmp.ne.s32.totalorder %s71, %s73
      %p80 = scmp.eq.s32.totalorder %s21, 7
      %p81 = por %p79, %p80
      %p82 = scmp.ne.s32.totalorder %s73, %s74
      %p83 = scmp.eq.s32.totalorder %s21, 0
      %p84 = por %p82, %p83
      %p85 = scmp.ne.s32.totalorder %s73, %s74
      %p86 = scmp.eq.s32.totalorder %s22, 7
      %p87 = por %p85, %p86
      %p89 = scmp.ne.s32.totalorder %s74, %s88
      %p90 = scmp.eq.s32.totalorder %s22, 0
      %p91 = por %p89, %p90
      %s93 = sadd.s32 %s92, 1
      %p96 = scmp.eq.s32.totalorder %s16, 7
      %p97 = scmp.ne.s32.totalorder %s92, %s94
      %p98 = scmp.eq.s32.totalorder %s16, 0
      %p99 = por %p97, %p98
      %p100 = scmp.ne.s32.totalorder %s92, %s94
      %p101 = scmp.eq.s32.totalorder %s21, 7
      %p102 = por %p100, %p101
      %p103 = scmp.ne.s32.totalorder %s94, %s95
      %p104 = scmp.eq.s32.totalorder %s21, 0
      %p105 = por %p103, %p104
      %p106 = scmp.ne.s32.totalorder %s94, %s95
      %p107 = scmp.eq.s32.totalorder %s22, 7
      %p108 = por %p106, %p107
      %p110 = scmp.ne.s32.totalorder %s95, %s109
      %p111 = scmp.eq.s32.totalorder %s22, 0
      %p112 = por %p110, %p111
      %s114 = sadd.s32 %s113, 1
      %p117 = scmp.eq.s32.totalorder %s16, 7
      %p118 = scmp.ne.s32.totalorder %s113, %s115
      %p119 = scmp.eq.s32.totalorder %s16, 0
      %p120 = por %p118, %p119
      %p121 = scmp.ne.s32.totalorder %s113, %s115
      %p122 = scmp.eq.s32.totalorder %s21, 7
      %p123 = por %p121, %p122
      %p124 = scmp.ne.s32.totalorder %s115, %s116
      %p125 = scmp.eq.s32.totalorder %s21, 0
      %p126 = por %p124, %p125
      %p127 = scmp.ne.s32.totalorder %s115, %s116
      %p128 = scmp.eq.s32.totalorder %s22, 7
      %p129 = por %p127, %p128
      %p131 = scmp.ne.s32.totalorder %s116, %s130
      %p132 = scmp.eq.s32.totalorder %s22, 0
      %p133 = por %p131, %p132
      %s135 = sadd.s32 %s134, 1
      %p138 = scmp.eq.s32.totalorder %s16, 7
      %p139 = scmp.ne.s32.totalorder %s134, %s136
      %p140 = scmp.eq.s32.totalorder %s16, 0
      %p141 = por %p139, %p140
      %p142 = scmp.ne.s32.totalorder %s134, %s136
      %p143 = scmp.eq.s32.totalorder %s21, 7
      %p144 = por %p142, %p143
      %p145 = scmp.ne.s32.totalorder %s136, %s137
      %p146 = scmp.eq.s32.totalorder %s21, 0
      %p147 = por %p145, %p146
      %p148 = scmp.ne.s32.totalorder %s136, %s137
      %p149 = scmp.eq.s32.totalorder %s22, 7
      %p150 = por %p148, %p149
      %p152 = scmp.ne.s32.totalorder %s137, %s151
      %p153 = scmp.eq.s32.totalorder %s22, 0
      %p154 = por %p152, %p153
      %s156 = sadd.s32 %s155, 1
      %p159 = scmp.eq.s32.totalorder %s16, 7
      %p160 = scmp.ne.s32.totalorder %s155, %s157
      %p161 = scmp.eq.s32.totalorder %s16, 0
      %p162 = por %p160, %p161
      %p163 = scmp.ne.s32.totalorder %s155, %s157
      %p164 = scmp.eq.s32.totalorder %s21, 7
      %p165 = por %p163, %p164
      %p166 = scmp.ne.s32.totalorder %s157, %s158
      %p167 = scmp.eq.s32.totalorder %s21, 0
      %p168 = por %p166, %p167
      %p169 = scmp.ne.s32.totalorder %s157, %s158
      %p170 = scmp.eq.s32.totalorder %s22, 7
      %p171 = por %p169, %p170
      %p173 = scmp.ne.s32.totalorder %s158, %s172
      %p174 = scmp.eq.s32.totalorder %s22, 0
      %p175 = por %p173, %p174
      %s177 = sadd.s32 %s176, 1
      %p180 = scmp.eq.s32.totalorder %s16, 7
      %p181 = scmp.ne.s32.totalorder %s176, %s178
      %p182 = scmp.eq.s32.totalorder %s16, 0
      %p183 = por %p181, %p182
      %p184 = scmp.ne.s32.totalorder %s176, %s178
      %p185 = scmp.eq.s32.totalorder %s21, 7
      %p186 = por %p184, %p185
      %p187 = scmp.ne.s32.totalorder %s178, %s179
      %p188 = scmp.eq.s32.totalorder %s21, 0
      %p189 = por %p187, %p188
      %p190 = scmp.ne.s32.totalorder %s178, %s179
      %p191 = scmp.eq.s32.totalorder %s22, 7
      %p192 = por %p190, %p191
      %p194 = scmp.ne.s32.totalorder %s179, %s193
      %p195 = scmp.eq.s32.totalorder %s22, 0
      %p196 = por %p194, %p195
      %p197 = scmp.le.s32.totalorder 1, %s16
      %p198 = scmp.lt.s32.totalorder %s16, 9
      %p199 = pnand %p197, %p198
      %p200 = pneg %p199
      // Predicated region
      $region9: #{tpu_custom_call.1} parent=5 // pred_check
        _
      $region10: #{tpu_custom_call.1} parent=5 // pred_check_branch
        %202 = sbr.rel (%p199) target = $region12
      $region11: #{tpu_custom_call.1} parent=5 // pred_region
        %s203 = ssub.s32 %s16, 1
        // Predicated region
        $region13: #{tpu_custom_call.1} parent=11 // pred_check
          %p204 = pneg %p63
        $region14: #{tpu_custom_call.1} parent=11 // pred_check_branch
          %206 = sbr.rel (%p204) target = $region16
        $region15: #{tpu_custom_call.1} parent=11 // pred_region
          _
        $region16: #{tpu_custom_call.1} parent=11 // pred_fallthru
          _
        // Predicated region
        $region17: #{tpu_custom_call.1} parent=11 // pred_check
          %p207 = pneg %p84
        $region18: #{tpu_custom_call.1} parent=11 // pred_check_branch
          %209 = sbr.rel (%p207) target = $region20
        $region19: #{tpu_custom_call.1} parent=11 // pred_region
          _
        $region20: #{tpu_custom_call.1} parent=11 // pred_fallthru
          _
        // Predicated region
        $region21: #{tpu_custom_call.1} parent=11 // pred_check
          %p210 = pneg %p105
        $region22: #{tpu_custom_call.1} parent=11 // pred_check_branch
          %212 = sbr.rel (%p210) target = $region24
        $region23: #{tpu_custom_call.1} parent=11 // pred_region
          _
        $region24: #{tpu_custom_call.1} parent=11 // pred_fallthru
          _
        // Predicated region
        $region25: #{tpu_custom_call.1} parent=11 // pred_check
          %p213 = pneg %p126
        $region26: #{tpu_custom_call.1} parent=11 // pred_check_branch
          %215 = sbr.rel (%p213) target = $region28
        $region27: #{tpu_custom_call.1} parent=11 // pred_region
          _
        $region28: #{tpu_custom_call.1} parent=11 // pred_fallthru
          _
        // Predicated region
        $region29: #{tpu_custom_call.1} parent=11 // pred_check
          %p216 = pneg %p147
        $region30: #{tpu_custom_call.1} parent=11 // pred_check_branch
          %218 = sbr.rel (%p216) target = $region32
        $region31: #{tpu_custom_call.1} parent=11 // pred_region
          _
        $region32: #{tpu_custom_call.1} parent=11 // pred_fallthru
          _
      $region12: #{tpu_custom_call.1} parent=5 // pred_fallthru
        _
      %p219 = scmp.lt.s32.totalorder %s16, 8
      // Predicated region
      $region33: #{tpu_custom_call.1} parent=5 // pred_check
        %p220 = pneg %p219
      $region34: #{tpu_custom_call.1} parent=5 // pred_check_branch
        %222 = sbr.rel (%p220) target = $region36
      $region35: #{tpu_custom_call.1} parent=5 // pred_region
        // Predicated region
        $region37: #{tpu_custom_call.1} parent=35 // pred_check
          %p223 = pneg %p36
        $region38: #{tpu_custom_call.1} parent=35 // pred_check_branch
          %225 = sbr.rel (%p223) target = $region40
        $region39: #{tpu_custom_call.1} parent=35 // pred_region
          %p226 = scmp.lt.s32.totalorder %s16, 7
          %s227 = scalar_select %p226, %s16, 7
          %s228 = smul.addr %s227, 4
          %s229 = scalar_lea.vmem %s0, %s228
        $region40: #{tpu_custom_call.1} parent=35 // pred_fallthru
          _
      $region36: #{tpu_custom_call.1} parent=5 // pred_fallthru
        _
      %p230 = scmp.le.s32.totalorder 1, %s16
      %p231 = scmp.lt.s32.totalorder %s16, 9
      %p232 = pnand %p230, %p231
      %p233 = pneg %p232
      // Predicated region
      $region41: #{tpu_custom_call.1} parent=5 // pred_check
        _
      $region42: #{tpu_custom_call.1} parent=5 // pred_check_branch
        %235 = sbr.rel (%p232) target = $region44
      $region43: #{tpu_custom_call.1} parent=5 // pred_region
        %s236 = ssub.s32 %s16, 1
        %p237 = scmp.lt.s32.totalorder %s21, 7
        %s238 = scalar_select %p237, %s21, 7
        %s239 = smul.addr %s238, 4
        %s240 = scalar_lea.vmem %s0, %s239
        %p241 = pneg %p42
        %p242 = pneg %p39
        %p243 = pneg %p63
        %p244 = pneg %p60
        %p245 = pneg %p84
        %p246 = pneg %p81
        %p247 = pneg %p105
        %p248 = pneg %p102
        %p249 = pneg %p126
        %p250 = pneg %p123
        %p251 = pneg %p147
        %p252 = pneg %p144
        %p253 = pneg %p168
        %p254 = pneg %p165
        %p255 = pneg %p189
        %p256 = pneg %p186
        %p257 = scmp.lt.s32.totalorder %s21, 7
        %s258 = scalar_select %p257, %s21, 7
        %s259 = smul.addr %s258, 4
        %s260 = scalar_lea.vmem %s0, %s259
        %p261 = scmp.eq.s32.totalorder %s21, 0
        // Predicated region
        $region45: #{tpu_custom_call.1} parent=43 // pred_check
          %p262 = pneg %p261
        $region46: #{tpu_custom_call.1} parent=43 // pred_check_branch
          %264 = sbr.rel (%p262) target = $region48
        $region47: #{tpu_custom_call.1} parent=43 // pred_region
          %v265 = vld [vmem:[%s1] sm:$0xf]
          %vm266 = vcmask 257024
          %267 = vst.msk [vmem:[#allocation2] sm:$0xf] %vm266, %v265
          %v268 = vld [vmem:[%s2] sm:$0xf]
          %269 = vst.msk [vmem:[#allocation3] sm:$0xf] %vm266, %v268
        $region48: #{tpu_custom_call.1} parent=43 // pred_fallthru
          _
        %v270 = vld [vmem:[%s260] sm:$0xf]
        %v271 = vld [vmem:[#allocation2] sm:$0xf]
        %v272 = vld [vmem:[#allocation3] sm:$0xf]
        %v273 = vld [vmem:[%s3] sm:$0x1f]
        %v274 = vld [vmem:[%s4] sm:$0xff]
        %v275 = vld [vmem:[%s4 + $0x8] sm:$0xff]
        %v276 = vld [vmem:[%s4 + $0x10] sm:$0xff]
        %v277 = vld [vmem:[%s4 + $0x18] sm:$0xff]
        %vm278 = vcmask 261120
        %v280 = vsel %vm278, %v271, 0
        %282 = vmatprep.subr.mxu0 0.0
        %v283 = vand.u32 %v274, 4294901760
        %284 = vmatpush1.msra.mxu0 %v283
        %285 = vmatprep.subr.mxu0 0.0
        %v286 = vand.u32 %v275, 4294901760
        %287 = vmatpush1.msra.mxu0 %v286
        %288 = vmatprep.subr.mxu0 0.0
        %v289 = vand.u32 %v276, 4294901760
        %290 = vmatpush1.msra.mxu0 %v289
        %291 = vmatprep.subr.mxu0 0.0
        %v292 = vand.u32 %v277, 4294901760
        %293 = vmatpush1.msra.mxu0 %v292
        %294 = vmatprep.subr.mxu0 0.0
        %295 = vmatpush1.msra.mxu0 0.0
        %296 = vmatprep.subr.mxu0 0.0
        %297 = vmatpush1.msra.mxu0 0.0
        %298 = vmatprep.subr.mxu0 0.0
        %299 = vmatpush1.msra.mxu0 0.0
        %300 = vmatprep.subr.mxu0 0.0
        %301 = vmatpush1.msra.mxu0 0.0
        %302 = vmatprep.subr.mxu0 0.0
        %303 = vmatpush1.msra.mxu0 0.0
        %304 = vmatprep.subr.mxu0 0.0
        %305 = vmatpush1.msra.mxu0 0.0
        %306 = vmatprep.subr.mxu0 0.0
        %307 = vmatpush1.msra.mxu0 0.0
        %308 = vmatprep.subr.mxu0 0.0
        %309 = vmatpush1.msra.mxu0 0.0
        %310 = vmatprep.subr.mxu0 0.0
        %311 = vmatpush1.msra.mxu0 0.0
        %312 = vmatprep.subr.mxu0 0.0
        %313 = vmatpush1.msra.mxu0 0.0
        %314 = vmatprep.subr.mxu0 0.0
        %315 = vmatpush1.msra.mxu0 0.0
        %316 = vmatprep.subr.mxu0 0.0
        %317 = vmatpush1.msra.mxu0 0.0
        %318 = vmatprep.subr.mxu0 0.0
        %319 = vmatpush1.msra.mxu0 0.0
        %320 = vmatprep.subr.mxu0 0.0
        %321 = vmatpush1.msra.mxu0 0.0
        %322 = vmatprep.subr.mxu0 0.0
        %323 = vmatpush1.msra.mxu0 0.0
        %324 = vmatprep.subr.mxu0 0.0
        %325 = vmatpush1.msra.mxu0 0.0
        %326 = vmatprep.subr.mxu0 0.0
        %327 = vmatpush1.msra.mxu0 0.0
        %328 = vmatprep.subr.mxu0 0.0
        %329 = vmatpush1.msra.mxu0 0.0
        %330 = vmatprep.subr.mxu0 0.0
        %331 = vmatpush1.msra.mxu0 0.0
        %332 = vmatprep.subr.mxu0 0.0
        %333 = vmatpush1.msra.mxu0 0.0
        %334 = vmatprep.subr.mxu0 0.0
        %335 = vmatpush1.msra.mxu0 0.0
        %336 = vmatprep.subr.mxu0 0.0
        %337 = vmatpush1.msra.mxu0 0.0
        %338 = vmatprep.subr.mxu0 0.0
        %339 = vmatpush1.msra.mxu0 0.0
        %340 = vmatprep.subr.mxu0 0.0
        %341 = vmatpush1.msra.mxu0 0.0
        %342 = vmatprep.subr.mxu0 0.0
        %343 = vmatpush1.msra.mxu0 0.0
        %344 = vmatprep.subr.mxu0 0.0
        %345 = vmatpush1.msra.mxu0 0.0
        %346 = vmatprep.subr.mxu0 0.0
        %347 = vmatpush1.msra.mxu0 0.0
        %348 = vmatprep.subr.mxu0 0.0
        %349 = vmatpush1.msra.mxu0 0.0
        %350 = vmatprep.mubr.f32.mxu0 0.0
        %v351 = vand.u32 %v280, 4294901760
        %v352 = vsub.f32 %v280, %v351
        %v353 = vand.u32 %v352, 4294901760
        %v354 = vsub.f32 %v352, %v353
        %v355 = vand.u32 %v354, 4294901760
        %356 = vmatmul.mubr.f32.gmra.mrb[0].mxu0 %v355
        %v357 = vpop.f32.mrb[0].mxu0
        %v358 = vadd.f32 0.0, %v357
        %v359 = vpop.f32.mrb[0].mxu0
        %360 = vdwg.mxu0
        %361 = vmatprep.subr.mxu0 0.0
        %v362 = vand.u32 %v274, 4294901760
        %v363 = vsub.f32 %v274, %v362
        %v364 = vand.u32 %v363, 4294901760
        %v365 = vsub.f32 %v363, %v364
        %v366 = vand.u32 %v365, 4294901760
        %367 = vmatpush1.msra.mxu0 %v366
        %368 = vmatprep.subr.mxu0 0.0
        %v369 = vand.u32 %v275, 4294901760
        %v370 = vsub.f32 %v275, %v369
        %v371 = vand.u32 %v370, 4294901760
        %v372 = vsub.f32 %v370, %v371
        %v373 = vand.u32 %v372, 4294901760
        %374 = vmatpush1.msra.mxu0 %v373
        %375 = vmatprep.subr.mxu0 0.0
        %v376 = vand.u32 %v276, 4294901760
        %v377 = vsub.f32 %v276, %v376
        %v378 = vand.u32 %v377, 4294901760
        %v379 = vsub.f32 %v377, %v378
        %v380 = vand.u32 %v379, 4294901760
        %381 = vmatpush1.msra.mxu0 %v380
        %382 = vmatprep.subr.mxu0 0.0
        %v383 = vand.u32 %v277, 4294901760
        %v384 = vsub.f32 %v277, %v383
        %v385 = vand.u32 %v384, 4294901760
        %v386 = vsub.f32 %v384, %v385
        %v387 = vand.u32 %v386, 4294901760
        %388 = vmatpush1.msra.mxu0 %v387
        %389 = vmatprep.subr.mxu0 0.0
        %390 = vmatpush1.msra.mxu0 0.0
        %391 = vmatprep.subr.mxu0 0.0
        %392 = vmatpush1.msra.mxu0 0.0
        %393 = vmatprep.subr.mxu0 0.0
        %394 = vmatpush1.msra.mxu0 0.0
        %395 = vmatprep.subr.mxu0 0.0
        %396 = vmatpush1.msra.mxu0 0.0
        %397 = vmatprep.subr.mxu0 0.0
        %398 = vmatpush1.msra.mxu0 0.0
        %399 = vmatprep.subr.mxu0 0.0
        %400 = vmatpush1.msra.mxu0 0.0
        %401 = vmatprep.subr.mxu0 0.0
        %402 = vmatpush1.msra.mxu0 0.0
        %403 = vmatprep.subr.mxu0 0.0
        %404 = vmatpush1.msra.mxu0 0.0
        %405 = vmatprep.subr.mxu0 0.0
        %406 = vmatpush1.msra.mxu0 0.0
        %407 = vmatprep.subr.mxu0 0.0
        %408 = vmatpush1.msra.mxu0 0.0
        %409 = vmatprep.subr.mxu0 0.0
        %410 = vmatpush1.msra.mxu0 0.0
        %411 = vmatprep.subr.mxu0 0.0
        %412 = vmatpush1.msra.mxu0 0.0
        %413 = vmatprep.subr.mxu0 0.0
        %414 = vmatpush1.msra.mxu0 0.0
        %415 = vmatprep.subr.mxu0 0.0
        %416 = vmatpush1.msra.mxu0 0.0
        %417 = vmatprep.subr.mxu0 0.0
        %418 = vmatpush1.msra.mxu0 0.0
        %419 = vmatprep.subr.mxu0 0.0
        %420 = vmatpush1.msra.mxu0 0.0
        %421 = vmatprep.subr.mxu0 0.0
        %422 = vmatpush1.msra.mxu0 0.0
        %423 = vmatprep.subr.mxu0 0.0
        %424 = vmatpush1.msra.mxu0 0.0
        %425 = vmatprep.subr.mxu0 0.0
        %426 = vmatpush1.msra.mxu0 0.0
        %427 = vmatprep.subr.mxu0 0.0
        %428 = vmatpush1.msra.mxu0 0.0
        %429 = vmatprep.subr.mxu0 0.0
        %430 = vmatpush1.msra.mxu0 0.0
        %431 = vmatprep.subr.mxu0 0.0
        %432 = vmatpush1.msra.mxu0 0.0
        %433 = vmatprep.subr.mxu0 0.0
        %434 = vmatpush1.msra.mxu0 0.0
        %435 = vmatprep.subr.mxu0 0.0
        %436 = vmatpush1.msra.mxu0 0.0
        %437 = vmatprep.subr.mxu0 0.0
        %438 = vmatpush1.msra.mxu0 0.0
        %439 = vmatprep.subr.mxu0 0.0
        %440 = vmatpush1.msra.mxu0 0.0
        %441 = vmatprep.subr.mxu0 0.0
        %442 = vmatpush1.msra.mxu0 0.0
        %443 = vmatprep.subr.mxu0 0.0
        %444 = vmatpush1.msra.mxu0 0.0
        %445 = vmatprep.mubr.f32.mxu0 0.0
        %v446 = vand.u32 %v280, 4294901760
        %447 = vmatmul.mubr.f32.gmra.mrb[0].mxu0 %v446
        %v448 = vpop.f32.mrb[0].mxu0
        %v449 = vadd.f32 %v358, %v448
        %v450 = vpop.f32.mrb[0].mxu0
        %451 = vdwg.mxu0
        %452 = vmatprep.subr.mxu0 0.0
        %v453 = vand.u32 %v274, 4294901760
        %v454 = vsub.f32 %v274, %v453
        %455 = vmatpush1.msra.mxu0 %v454
        %456 = vmatprep.subr.mxu0 0.0
        %v457 = vand.u32 %v275, 4294901760
        %v458 = vsub.f32 %v275, %v457
        %459 = vmatpush1.msra.mxu0 %v458
        %460 = vmatprep.subr.mxu0 0.0
        %v461 = vand.u32 %v276, 4294901760
        %v462 = vsub.f32 %v276, %v461
        %463 = vmatpush1.msra.mxu0 %v462
        %464 = vmatprep.subr.mxu0 0.0
        %v465 = vand.u32 %v277, 4294901760
        %v466 = vsub.f32 %v277, %v465
        %467 = vmatpush1.msra.mxu0 %v466
        %468 = vmatprep.subr.mxu0 0.0
        %469 = vmatpush1.msra.mxu0 0.0
        %470 = vmatprep.subr.mxu0 0.0
        %471 = vmatpush1.msra.mxu0 0.0
        %472 = vmatprep.subr.mxu0 0.0
        %473 = vmatpush1.msra.mxu0 0.0
        %474 = vmatprep.subr.mxu0 0.0
        %475 = vmatpush1.msra.mxu0 0.0
        %476 = vmatprep.subr.mxu0 0.0
        %477 = vmatpush1.msra.mxu0 0.0
        %478 = vmatprep.subr.mxu0 0.0
        %479 = vmatpush1.msra.mxu0 0.0
        %480 = vmatprep.subr.mxu0 0.0
        %481 = vmatpush1.msra.mxu0 0.0
        %482 = vmatprep.subr.mxu0 0.0
        %483 = vmatpush1.msra.mxu0 0.0
        %484 = vmatprep.subr.mxu0 0.0
        %485 = vmatpush1.msra.mxu0 0.0
        %486 = vmatprep.subr.mxu0 0.0
        %487 = vmatpush1.msra.mxu0 0.0
        %488 = vmatprep.subr.mxu0 0.0
        %489 = vmatpush1.msra.mxu0 0.0
        %490 = vmatprep.subr.mxu0 0.0
        %491 = vmatpush1.msra.mxu0 0.0
        %492 = vmatprep.subr.mxu0 0.0
        %493 = vmatpush1.msra.mxu0 0.0
        %494 = vmatprep.subr.mxu0 0.0
        %495 = vmatpush1.msra.mxu0 0.0
        %496 = vmatprep.subr.mxu0 0.0
        %497 = vmatpush1.msra.mxu0 0.0
        %498 = vmatprep.subr.mxu0 0.0
        %499 = vmatpush1.msra.mxu0 0.0
        %500 = vmatprep.subr.mxu0 0.0
        %501 = vmatpush1.msra.mxu0 0.0
        %502 = vmatprep.subr.mxu0 0.0
        %503 = vmatpush1.msra.mxu0 0.0
        %504 = vmatprep.subr.mxu0 0.0
        %505 = vmatpush1.msra.mxu0 0.0
        %506 = vmatprep.subr.mxu0 0.0
        %507 = vmatpush1.msra.mxu0 0.0
        %508 = vmatprep.subr.mxu0 0.0
        %509 = vmatpush1.msra.mxu0 0.0
        %510 = vmatprep.subr.mxu0 0.0
        %511 = vmatpush1.msra.mxu0 0.0
        %512 = vmatprep.subr.mxu0 0.0
        %513 = vmatpush1.msra.mxu0 0.0
        %514 = vmatprep.subr.mxu0 0.0
        %515 = vmatpush1.msra.mxu0 0.0
        %516 = vmatprep.subr.mxu0 0.0
        %517 = vmatpush1.msra.mxu0 0.0
        %518 = vmatprep.subr.mxu0 0.0
        %519 = vmatpush1.msra.mxu0 0.0
        %520 = vmatprep.subr.mxu0 0.0
        %521 = vmatpush1.msra.mxu0 0.0
        %522 = vmatprep.subr.mxu0 0.0
        %523 = vmatpush1.msra.mxu0 0.0
        %524 = vmatprep.mubr.f32.mxu0 0.0
        %v525 = vand.u32 %v280, 4294901760
        %v526 = vsub.f32 %v280, %v525
        %527 = vmatmul.mubr.f32.gmra.mrb[0].mxu0 %v526
        %v528 = vpop.f32.mrb[0].mxu0
        %v529 = vadd.f32 %v449, %v528
        %v530 = vpop.f32.mrb[0].mxu0
        %531 = vdwg.mxu0
        %532 = vmatprep.subr.mxu0 0.0
        %v533 = vand.u32 %v274, 4294901760
        %534 = vmatpush1.msra.mxu0 %v533
        %535 = vmatprep.subr.mxu0 0.0
        %v536 = vand.u32 %v275, 4294901760
        %537 = vmatpush1.msra.mxu0 %v536
        %538 = vmatprep.subr.mxu0 0.0
        %v539 = vand.u32 %v276, 4294901760
        %540 = vmatpush1.msra.mxu0 %v539
        %541 = vmatprep.subr.mxu0 0.0
        %v542 = vand.u32 %v277, 4294901760
        %543 = vmatpush1.msra.mxu0 %v542
        %544 = vmatprep.subr.mxu0 0.0
        %545 = vmatpush1.msra.mxu0 0.0
        %546 = vmatprep.subr.mxu0 0.0
        %547 = vmatpush1.msra.mxu0 0.0
        %548 = vmatprep.subr.mxu0 0.0
        %549 = vmatpush1.msra.mxu0 0.0
        %550 = vmatprep.subr.mxu0 0.0
        %551 = vmatpush1.msra.mxu0 0.0
        %552 = vmatprep.subr.mxu0 0.0
        %553 = vmatpush1.msra.mxu0 0.0
        %554 = vmatprep.subr.mxu0 0.0
        %555 = vmatpush1.msra.mxu0 0.0
        %556 = vmatprep.subr.mxu0 0.0
        %557 = vmatpush1.msra.mxu0 0.0
        %558 = vmatprep.subr.mxu0 0.0
        %559 = vmatpush1.msra.mxu0 0.0
        %560 = vmatprep.subr.mxu0 0.0
        %561 = vmatpush1.msra.mxu0 0.0
        %562 = vmatprep.subr.mxu0 0.0
        %563 = vmatpush1.msra.mxu0 0.0
        %564 = vmatprep.subr.mxu0 0.0
        %565 = vmatpush1.msra.mxu0 0.0
        %566 = vmatprep.subr.mxu0 0.0
        %567 = vmatpush1.msra.mxu0 0.0
        %568 = vmatprep.subr.mxu0 0.0
        %569 = vmatpush1.msra.mxu0 0.0
        %570 = vmatprep.subr.mxu0 0.0
        %571 = vmatpush1.msra.mxu0 0.0
        %572 = vmatprep.subr.mxu0 0.0
        %573 = vmatpush1.msra.mxu0 0.0
        %574 = vmatprep.subr.mxu0 0.0
        %575 = vmatpush1.msra.mxu0 0.0
        %576 = vmatprep.subr.mxu0 0.0
        %577 = vmatpush1.msra.mxu0 0.0
        %578 = vmatprep.subr.mxu0 0.0
        %579 = vmatpush1.msra.mxu0 0.0
        %580 = vmatprep.subr.mxu0 0.0
        %581 = vmatpush1.msra.mxu0 0.0
        %582 = vmatprep.subr.mxu0 0.0
        %583 = vmatpush1.msra.mxu0 0.0
        %584 = vmatprep.subr.mxu0 0.0
        %585 = vmatpush1.msra.mxu0 0.0
        %586 = vmatprep.subr.mxu0 0.0
        %587 = vmatpush1.msra.mxu0 0.0
        %588 = vmatprep.subr.mxu0 0.0
        %589 = vmatpush1.msra.mxu0 0.0
        %590 = vmatprep.subr.mxu0 0.0
        %591 = vmatpush1.msra.mxu0 0.0
        %592 = vmatprep.subr.mxu0 0.0
        %593 = vmatpush1.msra.mxu0 0.0
        %594 = vmatprep.subr.mxu0 0.0
        %595 = vmatpush1.msra.mxu0 0.0
        %596 = vmatprep.subr.mxu0 0.0
        %597 = vmatpush1.msra.mxu0 0.0
        %598 = vmatprep.subr.mxu0 0.0
        %599 = vmatpush1.msra.mxu0 0.0
        %600 = vmatprep.mubr.f32.mxu0 0.0
        %v601 = vand.u32 %v280, 4294901760
        %v602 = vsub.f32 %v280, %v601
        %v603 = vand.u32 %v602, 4294901760
        %604 = vmatmul.mubr.f32.gmra.mrb[0].mxu0 %v603
        %v605 = vpop.f32.mrb[0].mxu0
        %v606 = vadd.f32 %v529, %v605
        %v607 = vpop.f32.mrb[0].mxu0
        %608 = vdwg.mxu0
        %609 = vmatprep.subr.mxu0 0.0
        %v610 = vand.u32 %v274, 4294901760
        %v611 = vsub.f32 %v274, %v610
        %v612 = vand.u32 %v611, 4294901760
        %613 = vmatpush1.msra.mxu0 %v612
        %614 = vmatprep.subr.mxu0 0.0
        %v615 = vand.u32 %v275, 4294901760
        %v616 = vsub.f32 %v275, %v615
        %v617 = vand.u32 %v616, 4294901760
        %618 = vmatpush1.msra.mxu0 %v617
        %619 = vmatprep.subr.mxu0 0.0
        %v620 = vand.u32 %v276, 4294901760
        %v621 = vsub.f32 %v276, %v620
        %v622 = vand.u32 %v621, 4294901760
        %623 = vmatpush1.msra.mxu0 %v622
        %624 = vmatprep.subr.mxu0 0.0
        %v625 = vand.u32 %v277, 4294901760
        %v626 = vsub.f32 %v277, %v625
        %v627 = vand.u32 %v626, 4294901760
        %628 = vmatpush1.msra.mxu0 %v627
        %629 = vmatprep.subr.mxu0 0.0
        %630 = vmatpush1.msra.mxu0 0.0
        %631 = vmatprep.subr.mxu0 0.0
        %632 = vmatpush1.msra.mxu0 0.0
        %633 = vmatprep.subr.mxu0 0.0
        %634 = vmatpush1.msra.mxu0 0.0
        %635 = vmatprep.subr.mxu0 0.0
        %636 = vmatpush1.msra.mxu0 0.0
        %637 = vmatprep.subr.mxu0 0.0
        %638 = vmatpush1.msra.mxu0 0.0
        %639 = vmatprep.subr.mxu0 0.0
        %640 = vmatpush1.msra.mxu0 0.0
        %641 = vmatprep.subr.mxu0 0.0
        %642 = vmatpush1.msra.mxu0 0.0
        %643 = vmatprep.subr.mxu0 0.0
        %644 = vmatpush1.msra.mxu0 0.0
        %645 = vmatprep.subr.mxu0 0.0
        %646 = vmatpush1.msra.mxu0 0.0
        %647 = vmatprep.subr.mxu0 0.0
        %648 = vmatpush1.msra.mxu0 0.0
        %649 = vmatprep.subr.mxu0 0.0
        %650 = vmatpush1.msra.mxu0 0.0
        %651 = vmatprep.subr.mxu0 0.0
        %652 = vmatpush1.msra.mxu0 0.0
        %653 = vmatprep.subr.mxu0 0.0
        %654 = vmatpush1.msra.mxu0 0.0
        %655 = vmatprep.subr.mxu0 0.0
        %656 = vmatpush1.msra.mxu0 0.0
        %657 = vmatprep.subr.mxu0 0.0
        %658 = vmatpush1.msra.mxu0 0.0
        %659 = vmatprep.subr.mxu0 0.0
        %660 = vmatpush1.msra.mxu0 0.0
        %661 = vmatprep.subr.mxu0 0.0
        %662 = vmatpush1.msra.mxu0 0.0
        %663 = vmatprep.subr.mxu0 0.0
        %664 = vmatpush1.msra.mxu0 0.0
        %665 = vmatprep.subr.mxu0 0.0
        %666 = vmatpush1.msra.mxu0 0.0
        %667 = vmatprep.subr.mxu0 0.0
        %668 = vmatpush1.msra.mxu0 0.0
        %669 = vmatprep.subr.mxu0 0.0
        %670 = vmatpush1.msra.mxu0 0.0
        %671 = vmatprep.subr.mxu0 0.0
        %672 = vmatpush1.msra.mxu0 0.0
        %673 = vmatprep.subr.mxu0 0.0
        %674 = vmatpush1.msra.mxu0 0.0
        %675 = vmatprep.subr.mxu0 0.0
        %676 = vmatpush1.msra.mxu0 0.0
        %677 = vmatprep.subr.mxu0 0.0
        %678 = vmatpush1.msra.mxu0 0.0
        %679 = vmatprep.subr.mxu0 0.0
        %680 = vmatpush1.msra.mxu0 0.0
        %681 = vmatprep.subr.mxu0 0.0
        %682 = vmatpush1.msra.mxu0 0.0
        %683 = vmatprep.subr.mxu0 0.0
        %684 = vmatpush1.msra.mxu0 0.0
        %685 = vmatprep.mubr.f32.mxu0 0.0
        %v686 = vand.u32 %v280, 4294901760
        %687 = vmatmul.mubr.f32.gmra.mrb[0].mxu0 %v686
        %v688 = vpop.f32.mrb[0].mxu0
        %v689 = vadd.f32 %v606, %v688
        %v690 = vpop.f32.mrb[0].mxu0
        %691 = vdwg.mxu0
        %692 = vmatprep.subr.mxu0 0.0
        %v693 = vand.u32 %v274, 4294901760
        %694 = vmatpush1.msra.mxu0 %v693
        %695 = vmatprep.subr.mxu0 0.0
        %v696 = vand.u32 %v275, 4294901760
        %697 = vmatpush1.msra.mxu0 %v696
        %698 = vmatprep.subr.mxu0 0.0
        %v699 = vand.u32 %v276, 4294901760
        %700 = vmatpush1.msra.mxu0 %v699
        %701 = vmatprep.subr.mxu0 0.0
        %v702 = vand.u32 %v277, 4294901760
        %703 = vmatpush1.msra.mxu0 %v702
        %704 = vmatprep.subr.mxu0 0.0
        %705 = vmatpush1.msra.mxu0 0.0
        %706 = vmatprep.subr.mxu0 0.0
        %707 = vmatpush1.msra.mxu0 0.0
        %708 = vmatprep.subr.mxu0 0.0
        %709 = vmatpush1.msra.mxu0 0.0
        %710 = vmatprep.subr.mxu0 0.0
        %711 = vmatpush1.msra.mxu0 0.0
        %712 = vmatprep.subr.mxu0 0.0
        %713 = vmatpush1.msra.mxu0 0.0
        %714 = vmatprep.subr.mxu0 0.0
        %715 = vmatpush1.msra.mxu0 0.0
        %716 = vmatprep.subr.mxu0 0.0
        %717 = vmatpush1.msra.mxu0 0.0
        %718 = vmatprep.subr.mxu0 0.0
        %719 = vmatpush1.msra.mxu0 0.0
        %720 = vmatprep.subr.mxu0 0.0
        %721 = vmatpush1.msra.mxu0 0.0
        %722 = vmatprep.subr.mxu0 0.0
        %723 = vmatpush1.msra.mxu0 0.0
        %724 = vmatprep.subr.mxu0 0.0
        %725 = vmatpush1.msra.mxu0 0.0
        %726 = vmatprep.subr.mxu0 0.0
        %727 = vmatpush1.msra.mxu0 0.0
        %728 = vmatprep.subr.mxu0 0.0
        %729 = vmatpush1.msra.mxu0 0.0
        %730 = vmatprep.subr.mxu0 0.0
        %731 = vmatpush1.msra.mxu0 0.0
        %732 = vmatprep.subr.mxu0 0.0
        %733 = vmatpush1.msra.mxu0 0.0
        %734 = vmatprep.subr.mxu0 0.0
        %735 = vmatpush1.msra.mxu0 0.0
        %736 = vmatprep.subr.mxu0 0.0
        %737 = vmatpush1.msra.mxu0 0.0
        %738 = vmatprep.subr.mxu0 0.0
        %739 = vmatpush1.msra.mxu0 0.0
        %740 = vmatprep.subr.mxu0 0.0
        %741 = vmatpush1.msra.mxu0 0.0
        %742 = vmatprep.subr.mxu0 0.0
        %743 = vmatpush1.msra.mxu0 0.0
        %744 = vmatprep.subr.mxu0 0.0
        %745 = vmatpush1.msra.mxu0 0.0
        %746 = vmatprep.subr.mxu0 0.0
        %747 = vmatpush1.msra.mxu0 0.0
        %748 = vmatprep.subr.mxu0 0.0
        %749 = vmatpush1.msra.mxu0 0.0
        %750 = vmatprep.subr.mxu0 0.0
        %751 = vmatpush1.msra.mxu0 0.0
        %752 = vmatprep.subr.mxu0 0.0
        %753 = vmatpush1.msra.mxu0 0.0
        %754 = vmatprep.subr.mxu0 0.0
        %755 = vmatpush1.msra.mxu0 0.0
        %756 = vmatprep.subr.mxu0 0.0
        %757 = vmatpush1.msra.mxu0 0.0
        %758 = vmatprep.subr.mxu0 0.0
        %759 = vmatpush1.msra.mxu0 0.0
        %760 = vmatprep.mubr.f32.mxu0 0.0
        %v761 = vand.u32 %v280, 4294901760
        %762 = vmatmul.mubr.f32.gmra.mrb[0].mxu0 %v761
        %v763 = vpop.f32.mrb[0].mxu0
        %v764 = vadd.f32 %v689, %v763
        %v765 = vpop.f32.mrb[0].mxu0
        %766 = vdwg.mxu0
        %vm767 = vcmask 39936
        %v769 = vsel %vm767, %v270, 0
        %vm771 = vcmask 1044480
        %v773 = vsel %vm771, %v273, 0
        %775 = vmatprep.subr.mxu0 0.0
        %v776 = vand.u32 %v773, 4294901760
        %777 = vmatpush1.msra.mxu0 %v776
        %778 = vmatprep.subr.mxu0 0.0
        %779 = vmatpush1.msra.mxu0 0.0
        %780 = vmatprep.subr.mxu0 0.0
        %781 = vmatpush1.msra.mxu0 0.0
        %782 = vmatprep.subr.mxu0 0.0
        %783 = vmatpush1.msra.mxu0 0.0
        %784 = vmatprep.subr.mxu0 0.0
        %785 = vmatpush1.msra.mxu0 0.0
        %786 = vmatprep.subr.mxu0 0.0
        %787 = vmatpush1.msra.mxu0 0.0
        %788 = vmatprep.subr.mxu0 0.0
        %789 = vmatpush1.msra.mxu0 0.0
        %790 = vmatprep.subr.mxu0 0.0
        %791 = vmatpush1.msra.mxu0 0.0
        %792 = vmatprep.subr.mxu0 0.0
        %793 = vmatpush1.msra.mxu0 0.0
        %794 = vmatprep.subr.mxu0 0.0
        %795 = vmatpush1.msra.mxu0 0.0
        %796 = vmatprep.subr.mxu0 0.0
        %797 = vmatpush1.msra.mxu0 0.0
        %798 = vmatprep.subr.mxu0 0.0
        %799 = vmatpush1.msra.mxu0 0.0
        %800 = vmatprep.subr.mxu0 0.0
        %801 = vmatpush1.msra.mxu0 0.0
        %802 = vmatprep.subr.mxu0 0.0
        %803 = vmatpush1.msra.mxu0 0.0
        %804 = vmatprep.subr.mxu0 0.0
        %805 = vmatpush1.msra.mxu0 0.0
        %806 = vmatprep.subr.mxu0 0.0
        %807 = vmatpush1.msra.mxu0 0.0
        %808 = vmatprep.subr.mxu0 0.0
        %809 = vmatpush1.msra.mxu0 0.0
        %810 = vmatprep.subr.mxu0 0.0
        %811 = vmatpush1.msra.mxu0 0.0
        %812 = vmatprep.subr.mxu0 0.0
        %813 = vmatpush1.msra.mxu0 0.0
        %814 = vmatprep.subr.mxu0 0.0
        %815 = vmatpush1.msra.mxu0 0.0
        %816 = vmatprep.subr.mxu0 0.0
        %817 = vmatpush1.msra.mxu0 0.0
        %818 = vmatprep.subr.mxu0 0.0
        %819 = vmatpush1.msra.mxu0 0.0
        %820 = vmatprep.subr.mxu0 0.0
        %821 = vmatpush1.msra.mxu0 0.0
        %822 = vmatprep.subr.mxu0 0.0
        %823 = vmatpush1.msra.mxu0 0.0
        %824 = vmatprep.subr.mxu0 0.0
        %825 = vmatpush1.msra.mxu0 0.0
        %826 = vmatprep.subr.mxu0 0.0
        %827 = vmatpush1.msra.mxu0 0.0
        %828 = vmatprep.subr.mxu0 0.0
        %829 = vmatpush1.msra.mxu0 0.0
        %830 = vmatprep.subr.mxu0 0.0
        %831 = vmatpush1.msra.mxu0 0.0
        %832 = vmatprep.subr.mxu0 0.0
        %833 = vmatpush1.msra.mxu0 0.0
        %834 = vmatprep.subr.mxu0 0.0
        %835 = vmatpush1.msra.mxu0 0.0
        %836 = vmatprep.subr.mxu0 0.0
        %837 = vmatpush1.msra.mxu0 0.0
        %838 = vmatprep.subr.mxu0 0.0
        %839 = vmatpush1.msra.mxu0 0.0
        %840 = vmatprep.mubr.f32.mxu0 0.0
        %v841 = vand.u32 %v769, 4294901760
        %v842 = vsub.f32 %v769, %v841
        %v843 = vand.u32 %v842, 4294901760
        %v844 = vsub.f32 %v842, %v843
        %v845 = vand.u32 %v844, 4294901760
        %846 = vmatmul.mubr.f32.gmra.mrb[0].mxu0 %v845
        %v847 = vpop.f32.mrb[0].mxu0
        %v848 = vadd.f32 %v764, %v847
        %v849 = vpop.f32.mrb[0].mxu0
        %850 = vdwg.mxu0
        %851 = vmatprep.subr.mxu0 0.0
        %v852 = vand.u32 %v773, 4294901760
        %v853 = vsub.f32 %v773, %v852
        %v854 = vand.u32 %v853, 4294901760
        %v855 = vsub.f32 %v853, %v854
        %v856 = vand.u32 %v855, 4294901760
        %857 = vmatpush1.msra.mxu0 %v856
        %858 = vmatprep.subr.mxu0 0.0
        %859 = vmatpush1.msra.mxu0 0.0
        %860 = vmatprep.subr.mxu0 0.0
        %861 = vmatpush1.msra.mxu0 0.0
        %862 = vmatprep.subr.mxu0 0.0
        %863 = vmatpush1.msra.mxu0 0.0
        %864 = vmatprep.subr.mxu0 0.0
        %865 = vmatpush1.msra.mxu0 0.0
        %866 = vmatprep.subr.mxu0 0.0
        %867 = vmatpush1.msra.mxu0 0.0
        %868 = vmatprep.subr.mxu0 0.0
        %869 = vmatpush1.msra.mxu0 0.0
        %870 = vmatprep.subr.mxu0 0.0
        %871 = vmatpush1.msra.mxu0 0.0
        %872 = vmatprep.subr.mxu0 0.0
        %873 = vmatpush1.msra.mxu0 0.0
        %874 = vmatprep.subr.mxu0 0.0
        %875 = vmatpush1.msra.mxu0 0.0
        %876 = vmatprep.subr.mxu0 0.0
        %877 = vmatpush1.msra.mxu0 0.0
        %878 = vmatprep.subr.mxu0 0.0
        %879 = vmatpush1.msra.mxu0 0.0
        %880 = vmatprep.subr.mxu0 0.0
        %881 = vmatpush1.msra.mxu0 0.0
        %882 = vmatprep.subr.mxu0 0.0
        %883 = vmatpush1.msra.mxu0 0.0
        %884 = vmatprep.subr.mxu0 0.0
        %885 = vmatpush1.msra.mxu0 0.0
        %886 = vmatprep.subr.mxu0 0.0
        %887 = vmatpush1.msra.mxu0 0.0
        %888 = vmatprep.subr.mxu0 0.0
        %889 = vmatpush1.msra.mxu0 0.0
        %890 = vmatprep.subr.mxu0 0.0
        %891 = vmatpush1.msra.mxu0 0.0
        %892 = vmatprep.subr.mxu0 0.0
        %893 = vmatpush1.msra.mxu0 0.0
        %894 = vmatprep.subr.mxu0 0.0
        %895 = vmatpush1.msra.mxu0 0.0
        %896 = vmatprep.subr.mxu0 0.0
        %897 = vmatpush1.msra.mxu0 0.0
        %898 = vmatprep.subr.mxu0 0.0
        %899 = vmatpush1.msra.mxu0 0.0
        %900 = vmatprep.subr.mxu0 0.0
        %901 = vmatpush1.msra.mxu0 0.0
        %902 = vmatprep.subr.mxu0 0.0
        %903 = vmatpush1.msra.mxu0 0.0
        %904 = vmatprep.subr.mxu0 0.0
        %905 = vmatpush1.msra.mxu0 0.0
        %906 = vmatprep.subr.mxu0 0.0
        %907 = vmatpush1.msra.mxu0 0.0
        %908 = vmatprep.subr.mxu0 0.0
        %909 = vmatpush1.msra.mxu0 0.0
        %910 = vmatprep.subr.mxu0 0.0
        %911 = vmatpush1.msra.mxu0 0.0
        %912 = vmatprep.subr.mxu0 0.0
        %913 = vmatpush1.msra.mxu0 0.0
        %914 = vmatprep.subr.mxu0 0.0
        %915 = vmatpush1.msra.mxu0 0.0
        %916 = vmatprep.subr.mxu0 0.0
        %917 = vmatpush1.msra.mxu0 0.0
        %918 = vmatprep.subr.mxu0 0.0
        %919 = vmatpush1.msra.mxu0 0.0
        %920 = vmatprep.mubr.f32.mxu0 0.0
        %v921 = vand.u32 %v769, 4294901760
        %922 = vmatmul.mubr.f32.gmra.mrb[0].mxu0 %v921
        %v923 = vpop.f32.mrb[0].mxu0
        %v924 = vadd.f32 %v848, %v923
        %v925 = vpop.f32.mrb[0].mxu0
        %926 = vdwg.mxu0
        %927 = vmatprep.subr.mxu0 0.0
        %v928 = vand.u32 %v773, 4294901760
        %v929 = vsub.f32 %v773, %v928
        %930 = vmatpush1.msra.mxu0 %v929
        %931 = vmatprep.subr.mxu0 0.0
        %932 = vmatpush1.msra.mxu0 0.0
        %933 = vmatprep.subr.mxu0 0.0
        %934 = vmatpush1.msra.mxu0 0.0
        %935 = vmatprep.subr.mxu0 0.0
        %936 = vmatpush1.msra.mxu0 0.0
        %937 = vmatprep.subr.mxu0 0.0
        %938 = vmatpush1.msra.mxu0 0.0
        %939 = vmatprep.subr.mxu0 0.0
        %940 = vmatpush1.msra.mxu0 0.0
        %941 = vmatprep.subr.mxu0 0.0
        %942 = vmatpush1.msra.mxu0 0.0
        %943 = vmatprep.subr.mxu0 0.0
        %944 = vmatpush1.msra.mxu0 0.0
        %945 = vmatprep.subr.mxu0 0.0
        %946 = vmatpush1.msra.mxu0 0.0
        %947 = vmatprep.subr.mxu0 0.0
        %948 = vmatpush1.msra.mxu0 0.0
        %949 = vmatprep.subr.mxu0 0.0
        %950 = vmatpush1.msra.mxu0 0.0
        %951 = vmatprep.subr.mxu0 0.0
        %952 = vmatpush1.msra.mxu0 0.0
        %953 = vmatprep.subr.mxu0 0.0
        %954 = vmatpush1.msra.mxu0 0.0
        %955 = vmatprep.subr.mxu0 0.0
        %956 = vmatpush1.msra.mxu0 0.0
        %957 = vmatprep.subr.mxu0 0.0
        %958 = vmatpush1.msra.mxu0 0.0
        %959 = vmatprep.subr.mxu0 0.0
        %960 = vmatpush1.msra.mxu0 0.0
        %961 = vmatprep.subr.mxu0 0.0
        %962 = vmatpush1.msra.mxu0 0.0
        %963 = vmatprep.subr.mxu0 0.0
        %964 = vmatpush1.msra.mxu0 0.0
        %965 = vmatprep.subr.mxu0 0.0
        %966 = vmatpush1.msra.mxu0 0.0
        %967 = vmatprep.subr.mxu0 0.0
        %968 = vmatpush1.msra.mxu0 0.0
        %969 = vmatprep.subr.mxu0 0.0
        %970 = vmatpush1.msra.mxu0 0.0
        %971 = vmatprep.subr.mxu0 0.0
        %972 = vmatpush1.msra.mxu0 0.0
        %973 = vmatprep.subr.mxu0 0.0
        %974 = vmatpush1.msra.mxu0 0.0
        %975 = vmatprep.subr.mxu0 0.0
        %976 = vmatpush1.msra.mxu0 0.0
        %977 = vmatprep.subr.mxu0 0.0
        %978 = vmatpush1.msra.mxu0 0.0
        %979 = vmatprep.subr.mxu0 0.0
        %980 = vmatpush1.msra.mxu0 0.0
        %981 = vmatprep.subr.mxu0 0.0
        %982 = vmatpush1.msra.mxu0 0.0
        %983 = vmatprep.subr.mxu0 0.0
        %984 = vmatpush1.msra.mxu0 0.0
        %985 = vmatprep.subr.mxu0 0.0
        %986 = vmatpush1.msra.mxu0 0.0
        %987 = vmatprep.subr.mxu0 0.0
        %988 = vmatpush1.msra.mxu0 0.0
        %989 = vmatprep.subr.mxu0 0.0
        %990 = vmatpush1.msra.mxu0 0.0
        %991 = vmatprep.subr.mxu0 0.0
        %992 = vmatpush1.msra.mxu0 0.0
        %993 = vmatprep.mubr.f32.mxu0 0.0
        %v994 = vand.u32 %v769, 4294901760
        %v995 = vsub.f32 %v769, %v994
        %996 = vmatmul.mubr.f32.gmra.mrb[0].mxu0 %v995
        %v997 = vpop.f32.mrb[0].mxu0
        %v998 = vadd.f32 %v924, %v997
        %v999 = vpop.f32.mrb[0].mxu0
        %1000 = vdwg.mxu0
        %1001 = vmatprep.subr.mxu0 0.0
        %v1002 = vand.u32 %v773, 4294901760
        %1003 = vmatpush1.msra.mxu0 %v1002
        %1004 = vmatprep.subr.mxu0 0.0
        %1005 = vmatpush1.msra.mxu0 0.0
        %1006 = vmatprep.subr.mxu0 0.0
        %1007 = vmatpush1.msra.mxu0 0.0
        %1008 = vmatprep.subr.mxu0 0.0
        %1009 = vmatpush1.msra.mxu0 0.0
        %1010 = vmatprep.subr.mxu0 0.0
        %1011 = vmatpush1.msra.mxu0 0.0
        %1012 = vmatprep.subr.mxu0 0.0
        %1013 = vmatpush1.msra.mxu0 0.0
        %1014 = vmatprep.subr.mxu0 0.0
        %1015 = vmatpush1.msra.mxu0 0.0
        %1016 = vmatprep.subr.mxu0 0.0
        %1017 = vmatpush1.msra.mxu0 0.0
        %1018 = vmatprep.subr.mxu0 0.0
        %1019 = vmatpush1.msra.mxu0 0.0
        %1020 = vmatprep.subr.mxu0 0.0
        %1021 = vmatpush1.msra.mxu0 0.0
        %1022 = vmatprep.subr.mxu0 0.0
        %1023 = vmatpush1.msra.mxu0 0.0
        %1024 = vmatprep.subr.mxu0 0.0
        %1025 = vmatpush1.msra.mxu0 0.0
        %1026 = vmatprep.subr.mxu0 0.0
        %1027 = vmatpush1.msra.mxu0 0.0
        %1028 = vmatprep.subr.mxu0 0.0
        %1029 = vmatpush1.msra.mxu0 0.0
        %1030 = vmatprep.subr.mxu0 0.0
        %1031 = vmatpush1.msra.mxu0 0.0
        %1032 = vmatprep.subr.mxu0 0.0
        %1033 = vmatpush1.msra.mxu0 0.0
        %1034 = vmatprep.subr.mxu0 0.0
        %1035 = vmatpush1.msra.mxu0 0.0
        %1036 = vmatprep.subr.mxu0 0.0
        %1037 = vmatpush1.msra.mxu0 0.0
        %1038 = vmatprep.subr.mxu0 0.0
        %1039 = vmatpush1.msra.mxu0 0.0
        %1040 = vmatprep.subr.mxu0 0.0
        %1041 = vmatpush1.msra.mxu0 0.0
        %1042 = vmatprep.subr.mxu0 0.0
        %1043 = vmatpush1.msra.mxu0 0.0
        %1044 = vmatprep.subr.mxu0 0.0
        %1045 = vmatpush1.msra.mxu0 0.0
        %1046 = vmatprep.subr.mxu0 0.0
        %1047 = vmatpush1.msra.mxu0 0.0
        %1048 = vmatprep.subr.mxu0 0.0
        %1049 = vmatpush1.msra.mxu0 0.0
        %1050 = vmatprep.subr.mxu0 0.0
        %1051 = vmatpush1.msra.mxu0 0.0
        %1052 = vmatprep.subr.mxu0 0.0
        %1053 = vmatpush1.msra.mxu0 0.0
        %1054 = vmatprep.subr.mxu0 0.0
        %1055 = vmatpush1.msra.mxu0 0.0
        %1056 = vmatprep.subr.mxu0 0.0
        %1057 = vmatpush1.msra.mxu0 0.0
        %1058 = vmatprep.subr.mxu0 0.0
        %1059 = vmatpush1.msra.mxu0 0.0
        %1060 = vmatprep.subr.mxu0 0.0
        %1061 = vmatpush1.msra.mxu0 0.0
        %1062 = vmatprep.subr.mxu0 0.0
        %1063 = vmatpush1.msra.mxu0 0.0
        %1064 = vmatprep.subr.mxu0 0.0
        %1065 = vmatpush1.msra.mxu0 0.0
        %1066 = vmatprep.mubr.f32.mxu0 0.0
        %v1067 = vand.u32 %v769, 4294901760
        %v1068 = vsub.f32 %v769, %v1067
        %v1069 = vand.u32 %v1068, 4294901760
        %1070 = vmatmul.mubr.f32.gmra.mrb[0].mxu0 %v1069
        %v1071 = vpop.f32.mrb[0].mxu0
        %v1072 = vadd.f32 %v998, %v1071
        %v1073 = vpop.f32.mrb[0].mxu0
        %1074 = vdwg.mxu0
        %1075 = vmatprep.subr.mxu0 0.0
        %v1076 = vand.u32 %v773, 4294901760
        %v1077 = vsub.f32 %v773, %v1076
        %v1078 = vand.u32 %v1077, 4294901760
        %1079 = vmatpush1.msra.mxu0 %v1078
        %1080 = vmatprep.subr.mxu0 0.0
        %1081 = vmatpush1.msra.mxu0 0.0
        %1082 = vmatprep.subr.mxu0 0.0
        %1083 = vmatpush1.msra.mxu0 0.0
        %1084 = vmatprep.subr.mxu0 0.0
        %1085 = vmatpush1.msra.mxu0 0.0
        %1086 = vmatprep.subr.mxu0 0.0
        %1087 = vmatpush1.msra.mxu0 0.0
        %1088 = vmatprep.subr.mxu0 0.0
        %1089 = vmatpush1.msra.mxu0 0.0
        %1090 = vmatprep.subr.mxu0 0.0
        %1091 = vmatpush1.msra.mxu0 0.0
        %1092 = vmatprep.subr.mxu0 0.0
        %1093 = vmatpush1.msra.mxu0 0.0
        %1094 = vmatprep.subr.mxu0 0.0
        %1095 = vmatpush1.msra.mxu0 0.0
        %1096 = vmatprep.subr.mxu0 0.0
        %1097 = vmatpush1.msra.mxu0 0.0
        %1098 = vmatprep.subr.mxu0 0.0
        %1099 = vmatpush1.msra.mxu0 0.0
        %1100 = vmatprep.subr.mxu0 0.0
        %1101 = vmatpush1.msra.mxu0 0.0
        %1102 = vmatprep.subr.mxu0 0.0
        %1103 = vmatpush1.msra.mxu0 0.0
        %1104 = vmatprep.subr.mxu0 0.0
        %1105 = vmatpush1.msra.mxu0 0.0
        %1106 = vmatprep.subr.mxu0 0.0
        %1107 = vmatpush1.msra.mxu0 0.0
        %1108 = vmatprep.subr.mxu0 0.0
        %1109 = vmatpush1.msra.mxu0 0.0
        %1110 = vmatprep.subr.mxu0 0.0
        %1111 = vmatpush1.msra.mxu0 0.0
        %1112 = vmatprep.subr.mxu0 0.0
        %1113 = vmatpush1.msra.mxu0 0.0
        %1114 = vmatprep.subr.mxu0 0.0
        %1115 = vmatpush1.msra.mxu0 0.0
        %1116 = vmatprep.subr.mxu0 0.0
        %1117 = vmatpush1.msra.mxu0 0.0
        %1118 = vmatprep.subr.mxu0 0.0
        %1119 = vmatpush1.msra.mxu0 0.0
        %1120 = vmatprep.subr.mxu0 0.0
        %1121 = vmatpush1.msra.mxu0 0.0
        %1122 = vmatprep.subr.mxu0 0.0
        %1123 = vmatpush1.msra.mxu0 0.0
        %1124 = vmatprep.subr.mxu0 0.0
        %1125 = vmatpush1.msra.mxu0 0.0
        %1126 = vmatprep.subr.mxu0 0.0
        %1127 = vmatpush1.msra.mxu0 0.0
        %1128 = vmatprep.subr.mxu0 0.0
        %1129 = vmatpush1.msra.mxu0 0.0
        %1130 = vmatprep.subr.mxu0 0.0
        %1131 = vmatpush1.msra.mxu0 0.0
        %1132 = vmatprep.subr.mxu0 0.0
        %1133 = vmatpush1.msra.mxu0 0.0
        %1134 = vmatprep.subr.mxu0 0.0
        %1135 = vmatpush1.msra.mxu0 0.0
        %1136 = vmatprep.subr.mxu0 0.0
        %1137 = vmatpush1.msra.mxu0 0.0
        %1138 = vmatprep.subr.mxu0 0.0
        %1139 = vmatpush1.msra.mxu0 0.0
        %1140 = vmatprep.subr.mxu0 0.0
        %1141 = vmatpush1.msra.mxu0 0.0
        %1142 = vmatprep.mubr.f32.mxu0 0.0
        %v1143 = vand.u32 %v769, 4294901760
        %1144 = vmatmul.mubr.f32.gmra.mrb[0].mxu0 %v1143
        %v1145 = vpop.f32.mrb[0].mxu0
        %v1146 = vadd.f32 %v1072, %v1145
        %v1147 = vpop.f32.mrb[0].mxu0
        %1148 = vdwg.mxu0
        %1149 = vmatprep.subr.mxu0 0.0
        %v1150 = vand.u32 %v773, 4294901760
        %1151 = vmatpush1.msra.mxu0 %v1150
        %1152 = vmatprep.subr.mxu0 0.0
        %1153 = vmatpush1.msra.mxu0 0.0
        %1154 = vmatprep.subr.mxu0 0.0
        %1155 = vmatpush1.msra.mxu0 0.0
        %1156 = vmatprep.subr.mxu0 0.0
        %1157 = vmatpush1.msra.mxu0 0.0
        %1158 = vmatprep.subr.mxu0 0.0
        %1159 = vmatpush1.msra.mxu0 0.0
        %1160 = vmatprep.subr.mxu0 0.0
        %1161 = vmatpush1.msra.mxu0 0.0
        %1162 = vmatprep.subr.mxu0 0.0
        %1163 = vmatpush1.msra.mxu0 0.0
        %1164 = vmatprep.subr.mxu0 0.0
        %1165 = vmatpush1.msra.mxu0 0.0
        %1166 = vmatprep.subr.mxu0 0.0
        %1167 = vmatpush1.msra.mxu0 0.0
        %1168 = vmatprep.subr.mxu0 0.0
        %1169 = vmatpush1.msra.mxu0 0.0
        %1170 = vmatprep.subr.mxu0 0.0
        %1171 = vmatpush1.msra.mxu0 0.0
        %1172 = vmatprep.subr.mxu0 0.0
        %1173 = vmatpush1.msra.mxu0 0.0
        %1174 = vmatprep.subr.mxu0 0.0
        %1175 = vmatpush1.msra.mxu0 0.0
        %1176 = vmatprep.subr.mxu0 0.0
        %1177 = vmatpush1.msra.mxu0 0.0
        %1178 = vmatprep.subr.mxu0 0.0
        %1179 = vmatpush1.msra.mxu0 0.0
        %1180 = vmatprep.subr.mxu0 0.0
        %1181 = vmatpush1.msra.mxu0 0.0
        %1182 = vmatprep.subr.mxu0 0.0
        %1183 = vmatpush1.msra.mxu0 0.0
        %1184 = vmatprep.subr.mxu0 0.0
        %1185 = vmatpush1.msra.mxu0 0.0
        %1186 = vmatprep.subr.mxu0 0.0
        %1187 = vmatpush1.msra.mxu0 0.0
        %1188 = vmatprep.subr.mxu0 0.0
        %1189 = vmatpush1.msra.mxu0 0.0
        %1190 = vmatprep.subr.mxu0 0.0
        %1191 = vmatpush1.msra.mxu0 0.0
        %1192 = vmatprep.subr.mxu0 0.0
        %1193 = vmatpush1.msra.mxu0 0.0
        %1194 = vmatprep.subr.mxu0 0.0
        %1195 = vmatpush1.msra.mxu0 0.0
        %1196 = vmatprep.subr.mxu0 0.0
        %1197 = vmatpush1.msra.mxu0 0.0
        %1198 = vmatprep.subr.mxu0 0.0
        %1199 = vmatpush1.msra.mxu0 0.0
        %1200 = vmatprep.subr.mxu0 0.0
        %1201 = vmatpush1.msra.mxu0 0.0
        %1202 = vmatprep.subr.mxu0 0.0
        %1203 = vmatpush1.msra.mxu0 0.0
        %1204 = vmatprep.subr.mxu0 0.0
        %1205 = vmatpush1.msra.mxu0 0.0
        %1206 = vmatprep.subr.mxu0 0.0
        %1207 = vmatpush1.msra.mxu0 0.0
        %1208 = vmatprep.subr.mxu0 0.0
        %1209 = vmatpush1.msra.mxu0 0.0
        %1210 = vmatprep.subr.mxu0 0.0
        %1211 = vmatpush1.msra.mxu0 0.0
        %1212 = vmatprep.subr.mxu0 0.0
        %1213 = vmatpush1.msra.mxu0 0.0
        %1214 = vmatprep.mubr.f32.mxu0 0.0
        %v1215 = vand.u32 %v769, 4294901760
        %1216 = vmatmul.mubr.f32.gmra.mrb[0].mxu0 %v1215
        %v1217 = vpop.f32.mrb[0].mxu0
        %v1218 = vadd.f32 %v1146, %v1217
        %v1219 = vpop.f32.mrb[0].mxu0
        %1220 = vdwg.mxu0
        %v1221 = vld [vmem:[%s5] sm:$0x1]
        %v1223 = vlaneseq
        %v1224 = vshrl.u32 %v1223, 7
        %v1225 = vsub.s32 0, %v1224
        %v1226 = vrot.slane %v1221, %v1225
        %v1228 = vadd.f32 %v1218, %v1226
        %v1229 = vxor.u32 %v1228, 2147483648
        %v1230 = vmul.f32 %v1229, 1.442695
        %v1231 = vpow.pop %v1230
        %v1232 = vadd.f32 %v1231, 1.0
        %v1233 = vrcp.pop %v1232
        %v1234 = vmul.f32 1.0, %v1233
        %v1235 = vtanh.pop %v1228
        %v1236 = vmul.f32 %v1234, %v272
        %1238 = vrot.lane.b32.xlu0 %v1235, 64
        %v1239 = vpop.permute.xlu0 %1238
        %v1241 = vmul.f32 %v1234, %v1239
        %1243 = vrot.lane.b32.xlu0 %v1241, 96
        %v1244 = vpop.permute.xlu0 %1243
        %v1246 = vadd.f32 %v1236, %v1244
        %v1247 = vtanh.pop %v1246
        %1249 = vrot.lane.b32.xlu0 %v1247, 64
        %v1250 = vpop.permute.xlu0 %1249
        %v1252 = vmul.f32 %v1234, %v1250
        %vm1253 = vcmask 257024
        %1254 = vst.msk [vmem:[#allocation3] sm:$0xf] %vm1253, %v1246
        %1256 = vrot.lane.b32.xlu0 %v1252, 64
        %v1257 = vpop.permute.xlu0 %1256
        %1259 = vst.msk [vmem:[#allocation2] sm:$0xf] %vm1253, %v1257
        %p1260 = scmp.eq.s32.totalorder %s21, 7
        // Predicated region
        $region49: #{tpu_custom_call.1} parent=43 // pred_check
          %p1261 = pneg %p1260
        $region50: #{tpu_custom_call.1} parent=43 // pred_check_branch
          %1263 = sbr.rel (%p1261) target = $region52
        $region51: #{tpu_custom_call.1} parent=43 // pred_region
          %1264 = vst.msk [vmem:[#allocation4] sm:$0xf] %vm1253, %v1257
          %1265 = vst.msk [vmem:[#allocation6] sm:$0xf] %vm1253, %v1246
        $region52: #{tpu_custom_call.1} parent=43 // pred_fallthru
          _
        // Predicated region
        $region53: #{tpu_custom_call.1} parent=43 // pred_check
          %p1266 = pneg %p165
        $region54: #{tpu_custom_call.1} parent=43 // pred_check_branch
          %1268 = sbr.rel (%p1266) target = $region56
        $region55: #{tpu_custom_call.1} parent=43 // pred_region
          %s1270 = ssub.s32 64, 64
          %1271 = vsyncadd [#allocation5], %s1270
          %s1273 = sshll.u32 [#allocation4], 4
          %s1274 = int_to_ptr.vmem [resolvable:$true] %s1273
          %1276 = dma.vmem_to_hbm [thread:$0]  %s1274, 64, %s6, [#allocation5]
        $region56: #{tpu_custom_call.1} parent=43 // pred_fallthru
          _
        // Predicated region
        $region57: #{tpu_custom_call.1} parent=43 // pred_check
          %p1277 = pneg %p186
        $region58: #{tpu_custom_call.1} parent=43 // pred_check_branch
          %1279 = sbr.rel (%p1277) target = $region60
        $region59: #{tpu_custom_call.1} parent=43 // pred_region
          %s1281 = ssub.s32 64, 64
          %1282 = vsyncadd [#allocation7], %s1281
          %s1284 = sshll.u32 [#allocation6], 4
          %s1285 = int_to_ptr.vmem [resolvable:$true] %s1284
          %1287 = dma.vmem_to_hbm [thread:$0]  %s1285, 64, %s7, [#allocation7]
        $region60: #{tpu_custom_call.1} parent=43 // pred_fallthru
          _
        // Predicated region
        $region61: #{tpu_custom_call.1} parent=43 // pred_check
          %p1288 = pneg %p165
        $region62: #{tpu_custom_call.1} parent=43 // pred_check_branch
          %1290 = sbr.rel (%p1288) target = $region64
        $region63: #{tpu_custom_call.1} parent=43 // pred_region
          %1291 = dma.done [#allocation5], 64
        $region64: #{tpu_custom_call.1} parent=43 // pred_fallthru
          _
        // Predicated region
        $region65: #{tpu_custom_call.1} parent=43 // pred_check
          %p1292 = pneg %p186
        $region66: #{tpu_custom_call.1} parent=43 // pred_check_branch
          %1294 = sbr.rel (%p1292) target = $region68
        $region67: #{tpu_custom_call.1} parent=43 // pred_region
          %1295 = dma.done [#allocation7], 64
        $region68: #{tpu_custom_call.1} parent=43 // pred_fallthru
          _
      $region44: #{tpu_custom_call.1} parent=5 // pred_fallthru
        _
      %p1296 = scmp.le.s32.totalorder 2, %s16
      // Predicated region
      $region69: #{tpu_custom_call.1} parent=5 // pred_check
        %p1297 = pneg %p1296
      $region70: #{tpu_custom_call.1} parent=5 // pred_check_branch
        %1299 = sbr.rel (%p1297) target = $region72
      $region71: #{tpu_custom_call.1} parent=5 // pred_region
        %s1300 = ssub.s32 %s16, 2
      $region72: #{tpu_custom_call.1} parent=5 // pred_fallthru
        _
    $region6: #{tpu_custom_call.1} parent=1 // loop_footer
      %s20 = sadd.s32 1, %s16
    $region7: #{tpu_custom_call.1} parent=1 // loop_footer_branch
      %15 = sbr.rel target = $region3
    $region8: #{tpu_custom_call.1} parent=1 // loop_exit
      _
    %1301 = vsyncpa [#allocation5], 1
    %s1302 = scalar_lea.sflag [#allocation5], 1
    %1303 = vsyncpa %s1302, 1
    %1304 = vsyncpa [#allocation7], 1

</llo_original>
